<compile_context>
chip_gen: v5e
topology: v5e:2x2
jax: 0.10.0
libtpu: 0.0.40
codegen_flags: <defaults>
</compile_context>

<pallas_src>
import functools
import numpy as np
import jax
import jax.numpy as jnp
from jax import lax
from jax.experimental import pallas as pl
from jax.experimental.pallas import tpu as pltpu

NEG_INF = -1e30        # finite so fully-masked (padded) rows stay finite, never NaN
LEAKY_SLOPE = 0.2
LANE = 128
SUBLANE = 8


def _round_up(x, m):
    return (x + m - 1) // m * m


# ----------------------------------------------------------------------------- kernels

def _proj_kernel(x_ref, w_ref, comb_ref, asrc_t_ref, *, asrc_pad):
    """Row tile: one MXU matmul produces the combined slab
    [alpha_src | alpha_dst | per-head (h | 1)] and the transposed alpha_src."""
    comb = jnp.dot(x_ref[...], w_ref[...], preferred_element_type=jnp.float32)
    comb_ref[...] = comb                                        # lane-dense slab store
    # alpha_src occupies the first columns; one native 128-wide transpose, then keep the
    # first asrc_pad rows -> lane-dense [heads_pad, tile_m] store (no host transpose).
    asrc_t_ref[...] = comb[:, :LANE].T[:asrc_pad, :]


def _attn_kernel(adj_ref, comb_ref, asrc_t_ref, bias_ref, out_ref, *,
                 heads, d_out, adst_off, h_off, concat, apply_elu, inv_heads, pad_cols):
    """Masked multi-head attention + aggregation for one tile of target nodes."""
    tm = out_ref.shape[0]
    d_aug = d_out + 1

    # Additive softmax mask computed ONCE per tile (shared by every head).
    mask_bias = jnp.where(adj_ref[...] > 0, 0.0, NEG_INF)       # [TM, N] f32

    # Target-row alphas for this tile, read from the resident projection slab.
    r0 = pl.multiple_of(pl.program_id(0) * tm, tm)
    adst = comb_ref[pl.ds(r0, tm), adst_off:adst_off + heads]   # [TM, heads]

    # Per-head upper bound on the row max: leaky(a_dst_i + max_j a_src_j).
    # LeakyReLU is monotone and softmax is shift-invariant, so this is exact and
    # replaces a per-head [TM, N] cross-lane reduction with an [8, N] one.
    cmax = jnp.max(asrc_t_ref[...], axis=-1, keepdims=True)     # [heads_pad, 1]

    pieces = []
    acc = None
    for hd in range(heads):                                     # static unroll
        a_d = adst[:, hd:hd + 1]                                # [TM, 1]
        e = a_d + asrc_t_ref[hd:hd + 1, :]                      # [TM, N]
        e = jnp.maximum(e, LEAKY_SLOPE * e)                     # LeakyReLU(0.2)
        m = a_d + cmax[hd:hd + 1, :]
        m = jnp.maximum(m, LEAKY_SLOPE * m)                     # leaky of the bound
        p = jnp.exp((e - m) + mask_bias)                        # [TM, N], masked -> 0

        # One MXU pass: the augmented h block [h_hd | 1] yields the aggregation AND the
        # softmax denominator together (no XLU sum).
        agg = jnp.dot(p, comb_ref[:, h_off + hd * d_aug:h_off + (hd + 1) * d_aug],
                      preferred_element_type=jnp.float32)       # [TM, d_out + 1]
        s = agg[:, d_out:d_out + 1]
        o = agg[:, :d_out] * pl.reciprocal(jnp.maximum(s, 1e-30), approx=True)

        if concat:
            o = o + bias_ref[:, hd * d_out:(hd + 1) * d_out]
            if apply_elu:
                o = jnp.where(o > 0, o, jnp.expm1(o))           # ELU fused into layer 1
            pieces.append(o)
        else:
            acc = o if acc is None else acc + o

    if concat:
        if pad_cols > 0:
            # ones column (feeds next layer's fused denominator) + zero lane padding.
            idx = lax.broadcasted_iota(jnp.int32, (tm, pad_cols), 1)
            pieces.append((idx == 0).astype(jnp.float32))
        out_ref[...] = jnp.concatenate(pieces, axis=-1)         # single lane-dense store
    else:
        o = acc * inv_heads + bias_ref[...]
        if apply_elu:
            o = jnp.where(o > 0, o, jnp.expm1(o))
        out_ref[...] = o


# ------------------------------------------------------------------------ pallas wrappers

def _gat_projection(x, w_ext, *, asrc_pad, tile_m):
    n, in_rows = x.shape
    w_total = w_ext.shape[1]
    grid = (n // tile_m,)
    kernel = functools.partial(_proj_kernel, asrc_pad=asrc_pad)
    comb, asrc_t = pl.pallas_call(
        kernel,
        grid=grid,
        in_specs=[
            pl.BlockSpec((tile_m, in_rows), lambda i: (i, 0)),
            pl.BlockSpec((in_rows, w_total), lambda i: (0, 0)),      # weights resident
        ],
        out_specs=[
            pl.BlockSpec((tile_m, w_total), lambda i: (i, 0)),       # fused slab
            pl.BlockSpec((asrc_pad, tile_m), lambda i: (0, i)),      # alpha_src, transposed
        ],
        out_shape=[
            jax.ShapeDtypeStruct((n, w_total), jnp.float32),
            jax.ShapeDtypeStruct((asrc_pad, n), jnp.float32),
        ],
        compiler_params=pltpu.CompilerParams(
            dimension_semantics=("parallel",),
            vmem_limit_bytes=32 * 1024 * 1024),
    )(x, w_ext)
    return comb, asrc_t


def _gat_attention(adj_i8, comb, asrc_t, bias, *, heads, d_out, adst_off, h_off,
                   concat, apply_elu, out_width, pad_cols, tile_m):
    n = adj_i8.shape[0]
    w_total = comb.shape[1]
    asrc_pad = asrc_t.shape[0]
    bias_w = bias.shape[1]
    grid = (n // tile_m,)
    kernel = functools.partial(_attn_kernel, heads=heads, d_out=d_out,
                               adst_off=adst_off, h_off=h_off, concat=concat,
                               apply_elu=apply_elu, inv_heads=1.0 / heads,
                               pad_cols=pad_cols)
    cost = pl.CostEstimate(
        flops=int(2 * n * n * heads * (d_out + 1) + 6 * n * n * heads),
        transcendentals=int(n * n * heads),
        bytes_accessed=int(n * n + 4 * n * (w_total + asrc_pad + out_width)))
    return pl.pallas_call(
        kernel,
        grid=grid,
        in_specs=[
            pl.BlockSpec((tile_m, n), lambda i: (i, 0)),             # int8 adjacency rows
            pl.BlockSpec((n, w_total), lambda i: (0, 0)),            # projection slab, resident
            pl.BlockSpec((asrc_pad, n), lambda i: (0, 0)),           # source alphas, resident
            pl.BlockSpec((1, bias_w), lambda i: (0, 0)),             # bias, resident
        ],
        out_specs=pl.BlockSpec((tile_m, out_width), lambda i: (i, 0)),
        out_shape=jax.ShapeDtypeStruct((n, out_width), jnp.float32),
        compiler_params=pltpu.CompilerParams(
            dimension_semantics=("parallel",),
            vmem_limit_bytes=48 * 1024 * 1024),
        cost_estimate=cost,
    )(adj_i8, comb, asrc_t, bias)


def _build_w_ext(w, a_src, a_dst, *, heads, d_out, in_dim, in_rows, ones_row):
    """Host-side fused weight: columns = [alpha_src (pad 8) | alpha_dst | per-head (W_h | 1)],
    zero-padded to a multiple of 128 lanes. Row `ones_row` (the input's ones column)
    sources the per-head ones columns used to fold the softmax denominator into the MXU."""
    d_aug = d_out + 1
    asrc_pad = _round_up(heads, SUBLANE)
    adst_off = asrc_pad
    h_off = asrc_pad + heads
    w_total = _round_up(h_off + heads * d_aug, LANE)
    m = np.zeros((in_rows, w_total), np.float32)
    w_np = np.asarray(w, np.float32)
    as_np = np.asarray(a_src, np.float32)
    ad_np = np.asarray(a_dst, np.float32)
    for hd in range(heads):
        w_h = w_np[:, hd * d_out:(hd + 1) * d_out]                  # [in_dim, d_out]
        m[:in_dim, hd] = w_h @ as_np[hd]                            # alpha_src column
        m[:in_dim, adst_off + hd] = w_h @ ad_np[hd]                 # alpha_dst column
        m[:in_dim, h_off + hd * d_aug:h_off + hd * d_aug + d_out] = w_h
        m[ones_row, h_off + hd * d_aug + d_out] = 1.0               # ones column
    return jnp.asarray(m), asrc_pad, adst_off, h_off


def transductive_gat(x, adj, params, *, h1_heads, h1_dim, h2_heads, n_classes, tile_m=128):
    n, f_in = x.shape
    # >= 2 row tiles so the "parallel" grid axis shards across both v7x TensorCores.
    n_pad = _round_up(max(n, 2 * tile_m), tile_m)
    # Projection tile decoupled from the attention tile and raised (tiny per-step matmuls).
    tile_m_proj = max(t for t in (1024, 512, 256, 128) if n_pad % t == 0)

    # int8 edge mask; adj[i, j] != 0 means edge j -> i (incoming neighbours of target i).
    adj_i8 = jnp.zeros((n_pad, n_pad), jnp.int8).at[:n, :n].set((adj > 0).astype(jnp.int8))

    # Layer-1 input carries a trailing ones column (sources the fused denominator columns).
    x_p = jnp.zeros((n_pad, f_in + 1), jnp.float32).at[:n, :f_in].set(x)
    x_p = x_p.at[:, f_in].set(1.0)

    # ----------------------------- layer 1: GATConv(F -> D1, H1 heads, concat) + ELU
    w1_ext, asrc_pad1, adst_off1, h_off1 = _build_w_ext(
        params["w1"], params["a_src1"], params["a_dst1"],
        heads=h1_heads, d_out=h1_dim, in_dim=f_in, in_rows=f_in + 1, ones_row=f_in)
    comb1, asrc_t1 = _gat_projection(x_p, w1_ext, asrc_pad=asrc_pad1, tile_m=tile_m_proj)

    z1_real = h1_heads * h1_dim
    z1_w = _round_up(z1_real + 1, LANE)          # lane-dense; ones column at index z1_real
    z1 = _gat_attention(adj_i8, comb1, asrc_t1, params["b1"],
                        heads=h1_heads, d_out=h1_dim, adst_off=adst_off1, h_off=h_off1,
                        concat=True, apply_elu=True, out_width=z1_w,
                        pad_cols=z1_w - z1_real, tile_m=tile_m)

    # ----------------------------- layer 2: GATConv(H1*D1 -> C, H2 heads, mean)
    w2_ext, asrc_pad2, adst_off2, h_off2 = _build_w_ext(
        params["w2"], params["a_src2"], params["a_dst2"],
        heads=h2_heads, d_out=n_classes, in_dim=z1_real, in_rows=z1_w, ones_row=z1_real)
    comb2, asrc_t2 = _gat_projection(z1, w2_ext, asrc_pad=asrc_pad2, tile_m=tile_m_proj)
    out = _gat_attention(adj_i8, comb2, asrc_t2, params["b2"],
                         heads=h2_heads, d_out=n_classes, adst_off=adst_off2, h_off=h_off2,
                         concat=False, apply_elu=False, out_width=n_classes,
                         pad_cols=0, tile_m=tile_m)
    return out[:n]


# -------------------------------------------------------------------------------- main

if __name__ == "__main__":
    # Small transductive-GAT shapes (e.g. a tiny citation graph).
    N, F, C = 256, 32, 4          # nodes, num_features, num_classes
    H1, D1, H2 = 8, 8, 1          # input heads, hidden units (=8), output heads
    E = 1024                      # directed edges

    key = jax.random.PRNGKey(0)
    keys = jax.random.split(key, 9)

    x = jax.random.normal(keys[0], (N, F), jnp.float32)
    src = jax.random.randint(keys[1], (E,), 0, N)
    dst = jax.random.randint(keys[2], (E,), 0, N)
    adj = jnp.zeros((N, N), jnp.float32).at[dst, src].set(1.0)       # adj[i, j]: edge j -> i
    adj = jnp.maximum(adj, jnp.eye(N, dtype=jnp.float32))            # add_self_loops=True

    def glorot(k, shape):
        fan_in, fan_out = shape[-2], shape[-1]
        lim = (6.0 / (fan_in + fan_out)) ** 0.5
        return jax.random.uniform(k, shape, jnp.float32, -lim, lim)

    params = {
        "w1": glorot(keys[3], (F, H1 * D1)),
        "a_src1": glorot(keys[4], (H1, D1)),
        "a_dst1": glorot(keys[5], (H1, D1)),
        "b1": jnp.zeros((1, H1 * D1), jnp.float32),
        "w2": glorot(keys[6], (H1 * D1, H2 * C)),
        "a_src2": glorot(keys[7], (H2, C)),
        "a_dst2": glorot(keys[8], (H2, C)),
        "b2": jnp.zeros((1, C), jnp.float32),
    }

    out = transductive_gat(x, adj, params, h1_heads=H1, h1_dim=D1,
                           h2_heads=H2, n_classes=C, tile_m=128)
    out = jax.block_until_ready(out)

    # Pure-JAX reference (dense GATConv semantics) for a sanity check.
    def ref_layer(xv, adjv, w, a_src, a_dst, bias, heads, d_out, concat):
        h = xv @ w
        outs = []
        for hd in range(heads):
            h_h = h[:, hd * d_out:(hd + 1) * d_out]
            al_s = jnp.sum(h_h * a_src[hd], axis=-1)                 # [N]
            al_d = jnp.sum(h_h * a_dst[hd], axis=-1)                 # [N]
            e = al_d[:, None] + al_s[None, :]
            e = jnp.where(e > 0, e, 0.2 * e)
            e = jnp.where(adjv > 0, e, -1e30)
            attn = jax.nn.softmax(e, axis=-1)
            outs.append(attn @ h_h)
        o = jnp.concatenate(outs, axis=-1) if concat else sum(outs) / heads
        return o + bias

    zr = ref_layer(x, adj, params["w1"], params["a_src1"], params["a_dst1"], params["b1"],
                   H1, D1, True)
    zr = jnp.where(zr > 0, zr, jnp.expm1(zr))
    ref = ref_layer(zr, adj, params["w2"], params["a_src2"], params["a_dst2"], params["b2"],
                    H2, C, False)
    ref = jax.block_until_ready(ref)

    assert out.shape == (N, C)
    err = float(np.max(np.abs(np.asarray(out) - np.asarray(ref))))
    assert np.allclose(np.asarray(out), np.asarray(ref), rtol=2e-2, atol=2e-2), (
        f"max abs diff {err}")
    print("KERNEL_OK")
</pallas_src>

<mosaic_0001>
module attributes {stable_mosaic.version = 11 : i64} {
  func.func @_proj_kernel(%arg0: i32, %arg1: memref<256x33xf32, #tpu.memory_space<vmem>>, %arg2: memref<33x128xf32, #tpu.memory_space<vmem>>, %arg3: memref<256x128xf32, #tpu.memory_space<vmem>>, %arg4: memref<8x256xf32, #tpu.memory_space<vmem>>) attributes {dimension_semantics = [#tpu.dimension_semantics<parallel>], iteration_bounds = array<i64: 1>, scalar_prefetch = 0 : i64, scratch_operands = 0 : i64, tpu.core_type = #tpu.core_type<tc>, window_params = [{transform_indices = @transform_0, window_bounds = array<i64: 256, 33>}, {pipeline_mode = #tpu.pipeline_mode<synchronous>, transform_indices = @transform_1, window_bounds = array<i64: 33, 128>}, {transform_indices = @transform_2, window_bounds = array<i64: 256, 128>}, {transform_indices = @transform_3, window_bounds = array<i64: 8, 256>}]} {
    %c0 = arith.constant 0 : index
    %c0_0 = arith.constant 0 : index
    %0 = vector.load %arg1[%c0, %c0_0] : memref<256x33xf32, #tpu.memory_space<vmem>>, vector<256x33xf32>
    %c0_1 = arith.constant 0 : index
    %c0_2 = arith.constant 0 : index
    %1 = vector.load %arg2[%c0_1, %c0_2] : memref<33x128xf32, #tpu.memory_space<vmem>>, vector<33x128xf32>
    %cst = arith.constant dense<0.000000e+00> : vector<256x128xf32>
    %2 = tpu.matmul %0, %1, %cst {dimension_numbers = #tpu.dot_dimension_numbers<[1], [0], [0], [1], [0, 0, 1, 1], [], []>} : vector<256x33xf32>, vector<33x128xf32>, vector<256x128xf32> -> vector<256x128xf32>
    %c0_3 = arith.constant 0 : index
    %c0_4 = arith.constant 0 : index
    %3 = vector.load %arg3[%c0_3, %c0_4] : memref<256x128xf32, #tpu.memory_space<vmem>>, vector<256x128xf32>
    tpu.vector_store %arg3[%c0_3, %c0_4], %2 {strides = array<i32>} : memref<256x128xf32, #tpu.memory_space<vmem>>, vector<256x128xf32>,
    %4 = tpu.transpose %2, [1, 0] : vector<256x128xf32> -> vector<128x256xf32>
    %5 = vector.extract_strided_slice %4 {offsets = [0, 0], sizes = [8, 256], strides = [1, 1]} : vector<128x256xf32> to vector<8x256xf32>
    %c0_5 = arith.constant 0 : index
    %c0_6 = arith.constant 0 : index
    %6 = vector.load %arg4[%c0_5, %c0_6] : memref<8x256xf32, #tpu.memory_space<vmem>>, vector<8x256xf32>
    tpu.vector_store %arg4[%c0_5, %c0_6], %5 {strides = array<i32>} : memref<8x256xf32, #tpu.memory_space<vmem>>, vector<8x256xf32>,
    return
  }
  func.func @transform_0(%arg0: i32) -> (i32, i32) {
    %c0_i32 = arith.constant 0 : i32
    %c0_i32_0 = arith.constant 0 : i32
    return %arg0, %c0_i32 : i32, i32
  }
  func.func @transform_1(%arg0: i32) -> (i32, i32) {
    %c0_i32 = arith.constant 0 : i32
    %c0_i32_0 = arith.constant 0 : i32
    %c0_i32_1 = arith.constant 0 : i32
    return %c0_i32, %c0_i32_0 : i32, i32
  }
  func.func @transform_2(%arg0: i32) -> (i32, i32) {
    %c0_i32 = arith.constant 0 : i32
    %c0_i32_0 = arith.constant 0 : i32
    return %arg0, %c0_i32 : i32, i32
  }
  func.func @transform_3(%arg0: i32) -> (i32, i32) {
    %c0_i32 = arith.constant 0 : i32
    %c0_i32_0 = arith.constant 0 : i32
    return %c0_i32, %arg0 : i32, i32
  }
}

</mosaic_0001>

<llo_original>
// kernel: tpu_custom_call.1
$region0: #{tpu_custom_call.1}
  #allocation0 [shape = 'u32[]', space=smem, size = 0x4, offset = 0x4, fixed_abs, tag = 'smem constant byte address 0x4 - core index']
  #allocation1 [shape = 'u32[72,128]{1,0:T(1,128)}', space=vmem, size = 0x9000, scoped, tag = 'internal scratch']
  %s0 = inlined_call_operand.vmem [shape: f32[256,33], index: 0, kind: input, shape index: {}]
  %s1 = inlined_call_operand.vmem [shape: f32[33,128], index: 1, kind: input, shape index: {}]
  %s2 = inlined_call_operand.hbm [shape: f32[256,128], index: 2, kind: output, shape index: {0}]
  %s3 = inlined_call_operand.hbm [shape: f32[8,256], index: 3, kind: output, shape index: {1}]
  %4 = xla_tuple %s2, %s3
  %s5 = sld [smem:[#allocation0]]
  $region26: #{tpu_custom_call.1} parent=0
    _
  %s7 = ssub.s32 1, %s5
  %s8 = scalar_select 0, %s7, %s5
  $region1: #{tpu_custom_call.1} parent=0
    #allocation2 [shape = 'u8[131072]{0}', space=vmem, size = 0x20000, scoped, tag = 'output window, operand 0, single buffered']
    #allocation3 [shape = 's32[1]{0}', space=sflag, size = 0x4, scoped, tag = 'scoped memory for tpu_custom_call.1']
    #allocation4 [shape = 'u8[8192]{0}', space=vmem, size = 0x2000, scoped, tag = 'output window, operand 1, single buffered']
    #allocation5 [shape = 's32[1]{0}', space=sflag, size = 0x4, scoped, tag = 'scoped memory for tpu_custom_call.1']
    %9 = vsyncpa [#allocation3], 0
    %10 = vsyncpa [#allocation5], 0
    // Predicated region
    $region2: #{tpu_custom_call.1} parent=1 // pred_check
      _
    $region3: #{tpu_custom_call.1} parent=1 // pred_check_branch
      %12 = sbr.rel (0) target = $region5
    $region4: #{tpu_custom_call.1} parent=1 // pred_region
      _
    $region5: #{tpu_custom_call.1} parent=1 // pred_fallthru
      _
    // Predicated region
    $region6: #{tpu_custom_call.1} parent=1 // pred_check
      _
    $region7: #{tpu_custom_call.1} parent=1 // pred_check_branch
      %14 = sbr.rel (0) target = $region9
    $region8: #{tpu_custom_call.1} parent=1 // pred_region
      _
    $region9: #{tpu_custom_call.1} parent=1 // pred_fallthru
      _
    %v15 = vld [vmem:[%s0] sm:$0xff]
    %v16 = vld [vmem:[%s0 + $0x8] sm:$0xff]
    %v17 = vld [vmem:[%s0 + $0x10] sm:$0xff]
    %v18 = vld [vmem:[%s0 + $0x18] sm:$0xff]
    %v19 = vld [vmem:[%s0 + $0x20] sm:$0xff]
    %v20 = vld [vmem:[%s0 + $0x28] sm:$0xff]
    %v21 = vld [vmem:[%s0 + $0x30] sm:$0xff]
    %v22 = vld [vmem:[%s0 + $0x38] sm:$0xff]
    %v23 = vld [vmem:[%s0 + $0x40] sm:$0xff]
    %v24 = vld [vmem:[%s0 + $0x48] sm:$0xff]
    %v25 = vld [vmem:[%s0 + $0x50] sm:$0xff]
    %v26 = vld [vmem:[%s0 + $0x58] sm:$0xff]
    %v27 = vld [vmem:[%s0 + $0x60] sm:$0xff]
    %v28 = vld [vmem:[%s0 + $0x68] sm:$0xff]
    %v29 = vld [vmem:[%s0 + $0x70] sm:$0xff]
    %v30 = vld [vmem:[%s0 + $0x78] sm:$0xff]
    %v31 = vld [vmem:[%s0 + $0x80] sm:$0xff]
    %v32 = vld [vmem:[%s0 + $0x88] sm:$0xff]
    %v33 = vld [vmem:[%s0 + $0x90] sm:$0xff]
    %v34 = vld [vmem:[%s0 + $0x98] sm:$0xff]
    %v35 = vld [vmem:[%s0 + $0xa0] sm:$0xff]
    %v36 = vld [vmem:[%s0 + $0xa8] sm:$0xff]
    %v37 = vld [vmem:[%s0 + $0xb0] sm:$0xff]
    %v38 = vld [vmem:[%s0 + $0xb8] sm:$0xff]
    %v39 = vld [vmem:[%s0 + $0xc0] sm:$0xff]
    %v40 = vld [vmem:[%s0 + $0xc8] sm:$0xff]
    %v41 = vld [vmem:[%s0 + $0xd0] sm:$0xff]
    %v42 = vld [vmem:[%s0 + $0xd8] sm:$0xff]
    %v43 = vld [vmem:[%s0 + $0xe0] sm:$0xff]
    %v44 = vld [vmem:[%s0 + $0xe8] sm:$0xff]
    %v45 = vld [vmem:[%s0 + $0xf0] sm:$0xff]
    %v46 = vld [vmem:[%s0 + $0xf8] sm:$0xff]
    %v47 = vld [vmem:[%s1] sm:$0xff]
    %v48 = vld [vmem:[%s1 + $0x8] sm:$0xff]
    %v49 = vld [vmem:[%s1 + $0x10] sm:$0xff]
    %v50 = vld [vmem:[%s1 + $0x18] sm:$0xff]
    %v51 = vld [vmem:[%s1 + $0x20] sm:$0x1]
    %vm52 = vcmask 269312
    %v54 = vsel %vm52, %v15, 0
    %v57 = vsel %vm52, %v16, 0
    %v60 = vsel %vm52, %v17, 0
    %v63 = vsel %vm52, %v18, 0
    %v66 = vsel %vm52, %v19, 0
    %v69 = vsel %vm52, %v20, 0
    %v72 = vsel %vm52, %v21, 0
    %v75 = vsel %vm52, %v22, 0
    %v78 = vsel %vm52, %v23, 0
    %v81 = vsel %vm52, %v24, 0
    %v84 = vsel %vm52, %v25, 0
    %v87 = vsel %vm52, %v26, 0
    %v90 = vsel %vm52, %v27, 0
    %v93 = vsel %vm52, %v28, 0
    %v96 = vsel %vm52, %v29, 0
    %v99 = vsel %vm52, %v30, 0
    %v102 = vsel %vm52, %v31, 0
    %v105 = vsel %vm52, %v32, 0
    %v108 = vsel %vm52, %v33, 0
    %v111 = vsel %vm52, %v34, 0
    %v114 = vsel %vm52, %v35, 0
    %v117 = vsel %vm52, %v36, 0
    %v120 = vsel %vm52, %v37, 0
    %v123 = vsel %vm52, %v38, 0
    %v126 = vsel %vm52, %v39, 0
    %v129 = vsel %vm52, %v40, 0
    %v132 = vsel %vm52, %v41, 0
    %v135 = vsel %vm52, %v42, 0
    %v138 = vsel %vm52, %v43, 0
    %v141 = vsel %vm52, %v44, 0
    %v144 = vsel %vm52, %v45, 0
    %v147 = vsel %vm52, %v46, 0
    %vm149 = vcmask 1040384
    %v151 = vsel %vm149, %v51, 0
    %153 = vmatpush.msra.mxu0 0.0
    %154 = vmatpush.msra.mxu0 0.0
    %155 = vmatpush.msra.mxu0 0.0
    %156 = vmatpush.msra.mxu0 0.0
    %157 = vmatpush.msra.mxu0 0.0
    %158 = vmatpush.msra.mxu0 0.0
    %159 = vmatpush.msra.mxu0 0.0
    %160 = vmatpush.msra.mxu0 0.0
    %161 = vmatpush.msra.mxu0 0.0
    %162 = vmatpush.msra.mxu0 0.0
    %163 = vmatpush.msra.mxu0 0.0
    %164 = vmatpush.msra.mxu0 %v151
    %165 = vmatpush.msra.mxu0 %v50
    %166 = vmatpush.msra.mxu0 %v49
    %167 = vmatpush.msra.mxu0 %v48
    %168 = vmatpush.msra.mxu0 %v47
    %169 = vmatmul.f32.gmra.mxu0 %v54
    %v170 = vpop.f32.mrf.mxu0
    %v171 = vadd.f32 0.0, %v170
    %172 = vmatmul.f32.gmra.mxu0 %v57
    %v173 = vpop.f32.mrf.mxu0
    %v174 = vadd.f32 0.0, %v173
    %175 = vmatmul.f32.gmra.mxu0 %v60
    %v176 = vpop.f32.mrf.mxu0
    %v177 = vadd.f32 0.0, %v176
    %178 = vmatmul.f32.gmra.mxu0 %v63
    %v179 = vpop.f32.mrf.mxu0
    %v180 = vadd.f32 0.0, %v179
    %181 = vmatmul.f32.gmra.mxu0 %v66
    %v182 = vpop.f32.mrf.mxu0
    %v183 = vadd.f32 0.0, %v182
    %184 = vmatmul.f32.gmra.mxu0 %v69
    %v185 = vpop.f32.mrf.mxu0
    %v186 = vadd.f32 0.0, %v185
    %187 = vmatmul.f32.gmra.mxu0 %v72
    %v188 = vpop.f32.mrf.mxu0
    %v189 = vadd.f32 0.0, %v188
    %190 = vmatmul.f32.gmra.mxu0 %v75
    %v191 = vpop.f32.mrf.mxu0
    %v192 = vadd.f32 0.0, %v191
    %193 = vmatmul.f32.gmra.mxu0 %v78
    %v194 = vpop.f32.mrf.mxu0
    %v195 = vadd.f32 0.0, %v194
    %196 = vmatmul.f32.gmra.mxu0 %v81
    %v197 = vpop.f32.mrf.mxu0
    %v198 = vadd.f32 0.0, %v197
    %199 = vmatmul.f32.gmra.mxu0 %v84
    %v200 = vpop.f32.mrf.mxu0
    %v201 = vadd.f32 0.0, %v200
    %202 = vmatmul.f32.gmra.mxu0 %v87
    %v203 = vpop.f32.mrf.mxu0
    %v204 = vadd.f32 0.0, %v203
    %205 = vmatmul.f32.gmra.mxu0 %v90
    %v206 = vpop.f32.mrf.mxu0
    %v207 = vadd.f32 0.0, %v206
    %208 = vmatmul.f32.gmra.mxu0 %v93
    %v209 = vpop.f32.mrf.mxu0
    %v210 = vadd.f32 0.0, %v209
    %211 = vmatmul.f32.gmra.mxu0 %v96
    %v212 = vpop.f32.mrf.mxu0
    %v213 = vadd.f32 0.0, %v212
    %214 = vmatmul.f32.gmra.mxu0 %v99
    %v215 = vpop.f32.mrf.mxu0
    %v216 = vadd.f32 0.0, %v215
    %217 = vmatmul.f32.gmra.mxu0 %v102
    %v218 = vpop.f32.mrf.mxu0
    %v219 = vadd.f32 0.0, %v218
    %220 = vmatmul.f32.gmra.mxu0 %v105
    %v221 = vpop.f32.mrf.mxu0
    %v222 = vadd.f32 0.0, %v221
    %223 = vmatmul.f32.gmra.mxu0 %v108
    %v224 = vpop.f32.mrf.mxu0
    %v225 = vadd.f32 0.0, %v224
    %226 = vmatmul.f32.gmra.mxu0 %v111
    %v227 = vpop.f32.mrf.mxu0
    %v228 = vadd.f32 0.0, %v227
    %229 = vmatmul.f32.gmra.mxu0 %v114
    %v230 = vpop.f32.mrf.mxu0
    %v231 = vadd.f32 0.0, %v230
    %232 = vmatmul.f32.gmra.mxu0 %v117
    %v233 = vpop.f32.mrf.mxu0
    %v234 = vadd.f32 0.0, %v233
    %235 = vmatmul.f32.gmra.mxu0 %v120
    %v236 = vpop.f32.mrf.mxu0
    %v237 = vadd.f32 0.0, %v236
    %238 = vmatmul.f32.gmra.mxu0 %v123
    %v239 = vpop.f32.mrf.mxu0
    %v240 = vadd.f32 0.0, %v239
    %241 = vmatmul.f32.gmra.mxu0 %v126
    %v242 = vpop.f32.mrf.mxu0
    %v243 = vadd.f32 0.0, %v242
    %244 = vmatmul.f32.gmra.mxu0 %v129
    %v245 = vpop.f32.mrf.mxu0
    %v246 = vadd.f32 0.0, %v245
    %247 = vmatmul.f32.gmra.mxu0 %v132
    %v248 = vpop.f32.mrf.mxu0
    %v249 = vadd.f32 0.0, %v248
    %250 = vmatmul.f32.gmra.mxu0 %v135
    %v251 = vpop.f32.mrf.mxu0
    %v252 = vadd.f32 0.0, %v251
    %253 = vmatmul.f32.gmra.mxu0 %v138
    %v254 = vpop.f32.mrf.mxu0
    %v255 = vadd.f32 0.0, %v254
    %256 = vmatmul.f32.gmra.mxu0 %v141
    %v257 = vpop.f32.mrf.mxu0
    %v258 = vadd.f32 0.0, %v257
    %259 = vmatmul.f32.gmra.mxu0 %v144
    %v260 = vpop.f32.mrf.mxu0
    %v261 = vadd.f32 0.0, %v260
    %262 = vmatmul.f32.gmra.mxu0 %v147
    %v263 = vpop.f32.mrf.mxu0
    %v264 = vadd.f32 0.0, %v263
    %265 = vdwg.mxu0
    %266 = vst [vmem:[#allocation2] sm:$0xff] %v171
    %267 = vst [vmem:[#allocation2 + $0x8] sm:$0xff] %v174
    %268 = vst [vmem:[#allocation2 + $0x10] sm:$0xff] %v177
    %269 = vst [vmem:[#allocation2 + $0x18] sm:$0xff] %v180
    %270 = vst [vmem:[#allocation2 + $0x20] sm:$0xff] %v183
    %271 = vst [vmem:[#allocation2 + $0x28] sm:$0xff] %v186
    %272 = vst [vmem:[#allocation2 + $0x30] sm:$0xff] %v189
    %273 = vst [vmem:[#allocation2 + $0x38] sm:$0xff] %v192
    %274 = vst [vmem:[#allocation2 + $0x40] sm:$0xff] %v195
    %275 = vst [vmem:[#allocation2 + $0x48] sm:$0xff] %v198
    %276 = vst [vmem:[#allocation2 + $0x50] sm:$0xff] %v201
    %277 = vst [vmem:[#allocation2 + $0x58] sm:$0xff] %v204
    %278 = vst [vmem:[#allocation2 + $0x60] sm:$0xff] %v207
    %279 = vst [vmem:[#allocation2 + $0x68] sm:$0xff] %v210
    %280 = vst [vmem:[#allocation2 + $0x70] sm:$0xff] %v213
    %281 = vst [vmem:[#allocation2 + $0x78] sm:$0xff] %v216
    %282 = vst [vmem:[#allocation2 + $0x80] sm:$0xff] %v219
    %283 = vst [vmem:[#allocation2 + $0x88] sm:$0xff] %v222
    %284 = vst [vmem:[#allocation2 + $0x90] sm:$0xff] %v225
    %285 = vst [vmem:[#allocation2 + $0x98] sm:$0xff] %v228
    %286 = vst [vmem:[#allocation2 + $0xa0] sm:$0xff] %v231
    %287 = vst [vmem:[#allocation2 + $0xa8] sm:$0xff] %v234
    %288 = vst [vmem:[#allocation2 + $0xb0] sm:$0xff] %v237
    %289 = vst [vmem:[#allocation2 + $0xb8] sm:$0xff] %v240
    %290 = vst [vmem:[#allocation2 + $0xc0] sm:$0xff] %v243
    %291 = vst [vmem:[#allocation2 + $0xc8] sm:$0xff] %v246
    %292 = vst [vmem:[#allocation2 + $0xd0] sm:$0xff] %v249
    %293 = vst [vmem:[#allocation2 + $0xd8] sm:$0xff] %v252
    %294 = vst [vmem:[#allocation2 + $0xe0] sm:$0xff] %v255
    %295 = vst [vmem:[#allocation2 + $0xe8] sm:$0xff] %v258
    %296 = vst [vmem:[#allocation2 + $0xf0] sm:$0xff] %v261
    %297 = vst [vmem:[#allocation2 + $0xf8] sm:$0xff] %v264
    %298 = vxpose.xlu0.b32.start [1/16] %v171, 128
    %299 = vxpose.xlu0.b32.cont [2/16] %v174, 128
    %300 = vxpose.xlu0.b32.cont [3/16] %v177, 128
    %301 = vxpose.xlu0.b32.cont [4/16] %v180, 128
    %302 = vxpose.xlu0.b32.cont [5/16] %v183, 128
    %303 = vxpose.xlu0.b32.cont [6/16] %v186, 128
    %304 = vxpose.xlu0.b32.cont [7/16] %v189, 128
    %305 = vxpose.xlu0.b32.cont [8/16] %v192, 128
    %306 = vxpose.xlu0.b32.cont [9/16] %v195, 128
    %307 = vxpose.xlu0.b32.cont [10/16] %v198, 128
    %308 = vxpose.xlu0.b32.cont [11/16] %v201, 128
    %309 = vxpose.xlu0.b32.cont [12/16] %v204, 128
    %310 = vxpose.xlu0.b32.cont [13/16] %v207, 128
    %311 = vxpose.xlu0.b32.cont [14/16] %v210, 128
    %312 = vxpose.xlu0.b32.cont [15/16] %v213, 128
    %313 = vxpose.xlu0.b32.end [16/16] %v216, 128
    %v314 = vpop.trf.xlu0
    %v315 = vpop.trf.xlu0
    %v316 = vpop.trf.xlu0
    %v317 = vpop.trf.xlu0
    %v318 = vpop.trf.xlu0
    %v319 = vpop.trf.xlu0
    %v320 = vpop.trf.xlu0
    %v321 = vpop.trf.xlu0
    %v322 = vpop.trf.xlu0
    %v323 = vpop.trf.xlu0
    %v324 = vpop.trf.xlu0
    %v325 = vpop.trf.xlu0
    %v326 = vpop.trf.xlu0
    %v327 = vpop.trf.xlu0
    %v328 = vpop.trf.xlu0
    %v329 = vpop.trf.xlu0
    %330 = vxpose.xlu0.b32.start [1/16] %v219, 128
    %331 = vxpose.xlu0.b32.cont [2/16] %v222, 128
    %332 = vxpose.xlu0.b32.cont [3/16] %v225, 128
    %333 = vxpose.xlu0.b32.cont [4/16] %v228, 128
    %334 = vxpose.xlu0.b32.cont [5/16] %v231, 128
    %335 = vxpose.xlu0.b32.cont [6/16] %v234, 128
    %336 = vxpose.xlu0.b32.cont [7/16] %v237, 128
    %337 = vxpose.xlu0.b32.cont [8/16] %v240, 128
    %338 = vxpose.xlu0.b32.cont [9/16] %v243, 128
    %339 = vxpose.xlu0.b32.cont [10/16] %v246, 128
    %340 = vxpose.xlu0.b32.cont [11/16] %v249, 128
    %341 = vxpose.xlu0.b32.cont [12/16] %v252, 128
    %342 = vxpose.xlu0.b32.cont [13/16] %v255, 128
    %343 = vxpose.xlu0.b32.cont [14/16] %v258, 128
    %344 = vxpose.xlu0.b32.cont [15/16] %v261, 128
    %345 = vxpose.xlu0.b32.end [16/16] %v264, 128
    %v346 = vpop.trf.xlu0
    %v347 = vpop.trf.xlu0
    %v348 = vpop.trf.xlu0
    %v349 = vpop.trf.xlu0
    %v350 = vpop.trf.xlu0
    %v351 = vpop.trf.xlu0
    %v352 = vpop.trf.xlu0
    %v353 = vpop.trf.xlu0
    %v354 = vpop.trf.xlu0
    %v355 = vpop.trf.xlu0
    %v356 = vpop.trf.xlu0
    %v357 = vpop.trf.xlu0
    %v358 = vpop.trf.xlu0
    %v359 = vpop.trf.xlu0
    %v360 = vpop.trf.xlu0
    %v361 = vpop.trf.xlu0
    %362 = vst [vmem:[#allocation4] sm:$0xff] %v314
    %363 = vst [vmem:[#allocation4 + $0x8] sm:$0xff] %v346
    // Predicated region
    $region10: #{tpu_custom_call.1} parent=1 // pred_check
      _
    $region11: #{tpu_custom_call.1} parent=1 // pred_check_branch
      %365 = sbr.rel (0) target = $region13
    $region12: #{tpu_custom_call.1} parent=1 // pred_region
      %367 = vsyncadd [#allocation3], 0
      %s368 = sshll.u32 [#allocation2], 4
      %s369 = int_to_ptr.vmem [resolvable:$true] %s368
      %s370 = sshll.u32 %s2, 4
      %s371 = int_to_ptr.hbm [resolvable:$true] %s370
      %376 = dma.vmem_to_hbm [thread:$0]  %s369, 4096, %s371, [#allocation3], 128, 128, 8
    $region13: #{tpu_custom_call.1} parent=1 // pred_fallthru
      _
    // Predicated region
    $region14: #{tpu_custom_call.1} parent=1 // pred_check
      _
    $region15: #{tpu_custom_call.1} parent=1 // pred_check_branch
      %378 = sbr.rel (0) target = $region17
    $region16: #{tpu_custom_call.1} parent=1 // pred_region
      %380 = vsyncadd [#allocation5], 0
      %s382 = sshll.u32 [#allocation4], 4
      %s383 = int_to_ptr.vmem [resolvable:$true] %s382
      %s384 = sshll.u32 %s3, 4
      %s385 = int_to_ptr.hbm [resolvable:$true] %s384
      %387 = dma.vmem_to_hbm [thread:$0]  %s383, 256, %s385, [#allocation5]
    $region17: #{tpu_custom_call.1} parent=1 // pred_fallthru
      _
    // Predicated region
    $region18: #{tpu_custom_call.1} parent=1 // pred_check
      _
    $region19: #{tpu_custom_call.1} parent=1 // pred_check_branch
      %389 = sbr.rel (0) target = $region21
    $region20: #{tpu_custom_call.1} parent=1 // pred_region
      %391 = dma.done [#allocation3], 4096
    $region21: #{tpu_custom_call.1} parent=1 // pred_fallthru
      _
    // Predicated region
    $region22: #{tpu_custom_call.1} parent=1 // pred_check
      _
    $region23: #{tpu_custom_call.1} parent=1 // pred_check_branch
      %393 = sbr.rel (0) target = $region25
    $region24: #{tpu_custom_call.1} parent=1 // pred_region
      %395 = dma.done [#allocation5], 256
    $region25: #{tpu_custom_call.1} parent=1 // pred_fallthru
      _
    %396 = vsyncpa [#allocation3], 1
    %397 = vsyncpa [#allocation5], 1

</llo_original>
